<compile_context>
chip_gen: v7x
topology: tpu7x:2x2x1
jax: 0.10.0
libtpu: 0.0.40
codegen_flags: <defaults>
</compile_context>

<pallas_src>
import functools

import jax
import jax.numpy as jnp
from jax.experimental import pallas as pl
from jax.experimental.pallas import tpu as pltpu

LANES = 128
SUBLANES = 8
VREG_ELEMS = SUBLANES * LANES  # 1024


def _round_up(x, m):
    return -(-x // m) * m


# --------------------------------------------------------------------------- sum-of-squares kernel
def _sumsq_kernel(w_ref, partial_ref, *, rows_total, block_rows, blocks_per_shard, mask_tail):
    """grid = (shard, chunk). chunk walks this shard's row-blocks of a lane-dense [rows,128] slab.

    Accumulates sum(x^2) into a resident (8,128) f32 block per shard; only VPU work per chunk
    (one vreg load + square + add per (8,128) group), no cross-lane reduce in the hot loop.
    """
    c = pl.program_id(0)
    k = pl.program_id(1)

    @pl.when(k == 0)
    def _():
        partial_ref[...] = jnp.zeros_like(partial_ref)

    base_row = (c * blocks_per_shard + k) * block_rows
    n_sub = block_rows // SUBLANES  # block_rows is a multiple of 8 by construction

    if n_sub == 1:
        blk = w_ref[...].astype(jnp.float32)
        if mask_tail:
            ridx = base_row + jax.lax.broadcasted_iota(jnp.int32, (SUBLANES, LANES), 0)
            blk = jnp.where(ridx < rows_total, blk, 0.0)
        partial_ref[...] += blk * blk
    else:
        def accum(i, acc):
            off = pl.multiple_of(i * SUBLANES, SUBLANES)
            blk = w_ref[pl.ds(off, SUBLANES), :].astype(jnp.float32)
            if mask_tail:
                ridx = base_row + off + jax.lax.broadcasted_iota(jnp.int32, (SUBLANES, LANES), 0)
                blk = jnp.where(ridx < rows_total, blk, 0.0)
            return acc + blk * blk  # single (8,128) f32 accumulator vreg stays live

        acc = jax.lax.fori_loop(0, n_sub, accum,
                                jnp.zeros((SUBLANES, LANES), jnp.float32),
                                unroll=8 if n_sub >= 8 else True)
        partial_ref[...] += acc


# --------------------------------------------------------------------------- cross-entropy kernel
def _ce_kernel(logits_ref, target_ref, loss_ref, *, batch):
    """Mean cross-entropy over the batch. target_ref is a (B,1) int32 column (no dense one-hot)."""
    logits = logits_ref[...].astype(jnp.float32)                      # [B, C]
    m = jnp.max(logits, axis=-1, keepdims=True)
    lse = jnp.log(jnp.sum(jnp.exp(logits - m), axis=-1, keepdims=True)) + m
    logp = logits - lse
    b, c = logits.shape
    col = jax.lax.broadcasted_iota(jnp.int32, (b, c), 1)
    picked = jnp.where(col == target_ref[...], logp, 0.0)             # label mask built in-kernel
    loss_ref[...] = -jnp.sum(picked, keepdims=True) / batch


# --------------------------------------------------------------------------- generation-aware config
def _device_profile():
    kind = ""
    try:
        kind = jax.devices()[0].device_kind.lower()
    except Exception:
        pass
    if "v7" in kind or "7x" in kind:
        # 2 TensorCores/chip, 32 MiB scoped-VMEM default per TC: 8 MiB tiles double-buffer inside
        # the default; shard the row axis across both cores.
        # TODO(synk): confirm via xprof that the "parallel" shard axis really lands on both TCs;
        # if not, switch it to pltpu.CORE_PARALLEL / pl.core_map(create_tensorcore_mesh()).
        return {"tile_bytes": 8 << 20, "num_shards": 2, "vmem_limit": None}
    if "v6" in kind:
        # single TC, 128 MiB physical VMEM: bigger tiles + raised scoped limit amortize the
        # ~0.35us per-grid-step overhead at ~1.4 TB/s.
        return {"tile_bytes": 8 << 20, "num_shards": 1, "vmem_limit": 64 << 20}
    # v5e and anything unknown: 4 MiB tiles keep double-buffering inside the 16 MiB scoped default.
    return {"tile_bytes": 4 << 20, "num_shards": 1, "vmem_limit": None}


# --------------------------------------------------------------------------- streaming norm driver
def _sum_of_squares_slab(slab, *, tile_bytes, num_shards, vmem_limit):
    """Streams a lane-dense [rows,128] array (rows % 8 == 0) and returns sum(x^2) as an f32 scalar."""
    rows, lanes = slab.shape
    assert lanes == LANES and rows % SUBLANES == 0
    itemsize = jnp.dtype(slab.dtype).itemsize

    max_block_rows = max(SUBLANES, (tile_bytes // (LANES * itemsize)) // SUBLANES * SUBLANES)
    block_rows = min(max_block_rows, rows)
    total_blocks = -(-rows // block_rows)
    shards = num_shards if (num_shards > 1 and total_blocks % num_shards == 0
                            and total_blocks >= 2 * num_shards) else 1
    blocks_per_shard = total_blocks // shards
    mask_tail = (total_blocks * block_rows) != rows   # last block reads past the array -> mask garbage

    kernel = functools.partial(
        _sumsq_kernel, rows_total=rows, block_rows=block_rows,
        blocks_per_shard=blocks_per_shard, mask_tail=mask_tail)

    n_elems = rows * LANES
    cost = pl.CostEstimate(flops=2 * n_elems, transcendentals=0,
                           bytes_accessed=n_elems * itemsize + shards * SUBLANES * LANES * 4)

    partials = pl.pallas_call(
        kernel,
        out_shape=jax.ShapeDtypeStruct((shards * SUBLANES, LANES), jnp.float32),
        grid_spec=pltpu.PrefetchScalarGridSpec(
            num_scalar_prefetch=0,
            grid=(shards, blocks_per_shard),
            in_specs=[pl.BlockSpec((block_rows, LANES),
                                   lambda c, k: (c * blocks_per_shard + k, 0))],
            out_specs=pl.BlockSpec((SUBLANES, LANES), lambda c, k: (c, 0)),
        ),
        compiler_params=pltpu.CompilerParams(
            dimension_semantics=("parallel", "arbitrary"),
            vmem_limit_bytes=vmem_limit),
        cost_estimate=cost,
    )(slab)
    # tiny cross-lane reduce once per parameter, outside the streaming loop
    return jnp.sum(partials)


# --------------------------------------------------------------------------- public forward
def adaptive_weight_decay_forward(network_output, target, params, alpha=1e-8,
                                  *, tile_bytes=None, num_shards=None):
    """Pallas TPU version of AdaptiveWeightDecay.forward: returns (loss + alpha*||w||_2, loss).

    network_output: [B, C] float logits; target: [B] int class indices;
    params: list of the wrapped net's parameter arrays (only ndim > 1 enter the norm).
    """
    B, C = network_output.shape
    prof = _device_profile()
    tile_bytes = prof["tile_bytes"] if tile_bytes is None else tile_bytes
    num_shards = prof["num_shards"] if num_shards is None else num_shards
    vmem_limit = prof["vmem_limit"]

    # --- cross-entropy (mean over batch) as its own tiny kernel; no dense one-hot in HBM ------------
    target_col = target.astype(jnp.int32).reshape(B, 1)
    ce_cost = pl.CostEstimate(
        flops=8 * B * C, transcendentals=B * C + B,
        bytes_accessed=B * C * jnp.dtype(network_output.dtype).itemsize + B * 4 + 4)
    loss = pl.pallas_call(
        functools.partial(_ce_kernel, batch=float(B)),
        out_shape=jax.ShapeDtypeStruct((1, 1), jnp.float32),
        grid=(1,),
        in_specs=[pl.BlockSpec((B, C), lambda i: (0, 0)),
                  pl.BlockSpec((B, 1), lambda i: (0, 0))],
        out_specs=pl.BlockSpec((1, 1), lambda i: (0, 0)),
        cost_estimate=ce_cost,
    )(network_output, target_col)[0, 0]

    # --- ||w||_2 over all >1-dim params, streamed without a concatenated HBM slab -------------------
    weight_params = [p for p in params if p.ndim > 1]
    if not weight_params:
        w_norm = jnp.zeros((), jnp.float32)          # guard: no >1-dim params -> zero norm
    else:
        ssq = jnp.zeros((), jnp.float32)
        ragged = {}
        for p in weight_params:
            n = p.size
            if n % VREG_ELEMS == 0:
                # free (bitcast) reshape to a lane-dense [rows,128] view: bytes cross HBM once
                ssq = ssq + _sum_of_squares_slab(
                    p.reshape(n // LANES, LANES),
                    tile_bytes=tile_bytes, num_shards=num_shards, vmem_limit=vmem_limit)
            else:
                ragged.setdefault(jnp.dtype(p.dtype).name, []).append(p.reshape(-1))
        # ragged leftovers (typically small): per-dtype concat (no silent upcast) + zero-pad
        for _, vecs in sorted(ragged.items()):
            v = vecs[0] if len(vecs) == 1 else jnp.concatenate(vecs, axis=0)
            n = v.shape[0]
            padded = _round_up(n, VREG_ELEMS)
            slab = jnp.pad(v, (0, padded - n)).reshape(padded // LANES, LANES)
            ssq = ssq + _sum_of_squares_slab(
                slab, tile_bytes=tile_bytes, num_shards=num_shards, vmem_limit=vmem_limit)
        w_norm = jnp.sqrt(ssq)

    loss_reg = loss + alpha * w_norm
    return loss_reg, loss


# --------------------------------------------------------------------------- reference & self-test
def _reference(network_output, target, params, alpha):
    B = network_output.shape[0]
    logp = jax.nn.log_softmax(network_output.astype(jnp.float32), axis=-1)
    ref_loss = -jnp.mean(logp[jnp.arange(B), target])
    w = [p.reshape(-1).astype(jnp.float32) for p in params if p.ndim > 1]
    w_norm = jnp.linalg.norm(jnp.concatenate(w)) if w else jnp.zeros((), jnp.float32)
    return ref_loss + alpha * w_norm, ref_loss


if __name__ == "__main__":
    key = jax.random.PRNGKey(0)
    k1, k2, k3, k4, k5, k6, k7, k8 = jax.random.split(key, 8)

    B, C = 2, 10
    conv_w = jax.random.normal(k1, (8, 4, 3, 3), jnp.float32) * 0.1    # 288 elems -> ragged path
    conv_b = jax.random.normal(k2, (8,), jnp.float32) * 0.1            # ndim 1 -> excluded
    fc_w = jax.random.normal(k3, (C, 8 * 8 * 8), jnp.float32) * 0.05   # 5120 elems -> direct path
    fc_b = jax.random.normal(k4, (C,), jnp.float32) * 0.05             # ndim 1 -> excluded
    network_output = jax.random.normal(k5, (B, C), jnp.float32)
    target = jax.random.randint(k6, (B,), 0, C, jnp.int32)

    def check(got, ref, tag):
        assert jnp.allclose(got, ref, rtol=1e-4, atol=1e-5), (tag, got, ref)

    # case 1: tiny net (direct + ragged single-block paths)
    params1 = [conv_w, conv_b, fc_w, fc_b]
    loss_reg, loss = adaptive_weight_decay_forward(network_output, target, params1, alpha=1e-8)
    jax.block_until_ready((loss_reg, loss))
    ref_reg, ref_loss = _reference(network_output, target, params1, 1e-8)
    check(loss, ref_loss, "case1 loss"); check(loss_reg, ref_reg, "case1 loss_reg")

    # case 2: larger weight, device-profile tiling (multi-block + masked tail on v5e, 1 block on v6e+)
    big_w = jax.random.normal(k7, (1024, 1280), jnp.float32) * 0.02
    params2 = params1 + [big_w]
    alpha2 = 0.05                                                      # self.alpha after update_alpha()
    loss_reg2, loss2 = adaptive_weight_decay_forward(network_output, target, params2, alpha=alpha2)
    jax.block_until_ready((loss_reg2, loss2))
    ref_reg2, ref_loss2 = _reference(network_output, target, params2, alpha2)
    check(loss2, ref_loss2, "case2 loss"); check(loss_reg2, ref_reg2, "case2 loss_reg")

    # case 3: force the tiled + masked-tail + 2-shard streaming path regardless of chip generation
    odd_w = jax.random.normal(k8, (1000, 1280), jnp.float32) * 0.02    # 10000 rows -> partial last block
    params3 = params1 + [odd_w]
    loss_reg3, loss3 = adaptive_weight_decay_forward(
        network_output, target, params3, alpha=alpha2, tile_bytes=128 * 1024, num_shards=2)
    jax.block_until_ready((loss_reg3, loss3))
    ref_reg3, ref_loss3 = _reference(network_output, target, params3, alpha2)
    check(loss3, ref_loss3, "case3 loss"); check(loss_reg3, ref_reg3, "case3 loss_reg")

    # case 4: no >1-dim params -> zero-norm guard, loss_reg == loss
    loss_reg4, loss4 = adaptive_weight_decay_forward(network_output, target, [conv_b, fc_b], alpha=1.0)
    jax.block_until_ready((loss_reg4, loss4))
    check(loss4, ref_loss, "case4 loss"); check(loss_reg4, loss4, "case4 reg==loss")

    print("KERNEL_OK")
</pallas_src>

<mosaic_0001>
module attributes {stable_mosaic.version = 11 : i64} {
  func.func @_ce_kernel(%arg0: i32, %arg1: memref<2x10xf32, #tpu.memory_space<vmem>>, %arg2: memref<2x1xi32, #tpu.memory_space<vmem>>, %arg3: memref<1x1xf32, #tpu.memory_space<vmem>>) attributes {dimension_semantics = [#tpu.dimension_semantics<arbitrary>], iteration_bounds = array<i64: 1>, scalar_prefetch = 0 : i64, scratch_operands = 0 : i64, tpu.core_type = #tpu.core_type<tc>, window_params = [{pipeline_mode = #tpu.pipeline_mode<synchronous>, transform_indices = @transform_0, window_bounds = array<i64: 2, 10>}, {pipeline_mode = #tpu.pipeline_mode<synchronous>, transform_indices = @transform_1, window_bounds = array<i64: 2, 1>}, {pipeline_mode = #tpu.pipeline_mode<synchronous>, transform_indices = @transform_2, window_bounds = array<i64: 1, 1>}]} {
    %c0 = arith.constant 0 : index
    %c0_0 = arith.constant 0 : index
    %0 = vector.load %arg1[%c0, %c0_0] : memref<2x10xf32, #tpu.memory_space<vmem>>, vector<2x10xf32>
    %cst = arith.constant dense<0xFF800000> : vector<2xf32>
    %1 = vector.multi_reduction <maximumf>, %0, %cst [1] : vector<2x10xf32> to vector<2xf32>
    %2 = vector.shape_cast %1 : vector<2xf32> to vector<2x1xf32>
    %3 = vector.broadcast %2 : vector<2x1xf32> to vector<2x10xf32>
    %4 = arith.subf %0, %3 : vector<2x10xf32>
    %5 = math.exp %4 : vector<2x10xf32>
    %cst_1 = arith.constant dense<0.000000e+00> : vector<2xf32>
    %6 = vector.multi_reduction <add>, %5, %cst_1 [1] : vector<2x10xf32> to vector<2xf32>
    %7 = vector.shape_cast %6 : vector<2xf32> to vector<2x1xf32>
    %8 = math.log %7 : vector<2x1xf32>
    %9 = arith.addf %8, %2 : vector<2x1xf32>
    %10 = vector.broadcast %9 : vector<2x1xf32> to vector<2x10xf32>
    %11 = arith.subf %0, %10 : vector<2x10xf32>
    %12 = tpu.iota {dimensions = array<i32: 1>} : vector<2x10xi32>
    %c0_2 = arith.constant 0 : index
    %c0_3 = arith.constant 0 : index
    %13 = vector.load %arg2[%c0_2, %c0_3] : memref<2x1xi32, #tpu.memory_space<vmem>>, vector<2x1xi32>
    %14 = vector.broadcast %13 : vector<2x1xi32> to vector<2x10xi32>
    %15 = arith.cmpi eq, %12, %14 : vector<2x10xi32>
    %cst_4 = arith.constant 0.000000e+00 : f32
    %16 = vector.broadcast %cst_4 : f32 to vector<2x10xf32>
    %17 = arith.select %15, %11, %16 : vector<2x10xi1>, vector<2x10xf32>
    %18 = vector.shape_cast %17 : vector<2x10xf32> to vector<1x2x10xf32>
    %cst_5 = arith.constant dense<0.000000e+00> : vector<1xf32>
    %19 = vector.multi_reduction <add>, %18, %cst_5 [1, 2] : vector<1x2x10xf32> to vector<1xf32>
    %20 = vector.shape_cast %19 : vector<1xf32> to vector<1x1x1xf32>
    %21 = vector.extract %20[0, 0, 0] : f32 from vector<1x1x1xf32>
    %22 = vector.broadcast %21 : f32 to vector<1x1xf32>
    %cst_6 = arith.constant 0.000000e+00 : f32
    %23 = vector.broadcast %cst_6 : f32 to vector<1x1xf32>
    %24 = arith.subf %23, %22 : vector<1x1xf32>
    %cst_7 = arith.constant 2.000000e+00 : f32
    %25 = vector.broadcast %cst_7 : f32 to vector<1x1xf32>
    %26 = arith.divf %24, %25 : vector<1x1xf32>
    %c0_8 = arith.constant 0 : index
    %c0_9 = arith.constant 0 : index
    %27 = vector.load %arg3[%c0_8, %c0_9] : memref<1x1xf32, #tpu.memory_space<vmem>>, vector<1x1xf32>
    tpu.vector_store %arg3[%c0_8, %c0_9], %26 {strides = array<i32>} : memref<1x1xf32, #tpu.memory_space<vmem>>, vector<1x1xf32>,
    return
  }
  func.func @transform_0(%arg0: i32) -> (i32, i32) {
    %c0_i32 = arith.constant 0 : i32
    %c0_i32_0 = arith.constant 0 : i32
    %c0_i32_1 = arith.constant 0 : i32
    return %c0_i32, %c0_i32_0 : i32, i32
  }
  func.func @transform_1(%arg0: i32) -> (i32, i32) {
    %c0_i32 = arith.constant 0 : i32
    %c0_i32_0 = arith.constant 0 : i32
    %c0_i32_1 = arith.constant 0 : i32
    return %c0_i32, %c0_i32_0 : i32, i32
  }
  func.func @transform_2(%arg0: i32) -> (i32, i32) {
    %c0_i32 = arith.constant 0 : i32
    %c0_i32_0 = arith.constant 0 : i32
    %c0_i32_1 = arith.constant 0 : i32
    return %c0_i32, %c0_i32_0 : i32, i32
  }
}

</mosaic_0001>

<llo_original>
// kernel: tpu_custom_call.1
$region0: #{tpu_custom_call.1}
  #allocation0 [shape = 'u32[]', space=smem, size = 0x4, offset = 0x4, fixed_abs, tag = 'smem constant byte address 0x4 - core index']
  #allocation1 [shape = 'u32[144,128]{1,0:T(1,128)}', space=vmem, size = 0x12000, scoped, tag = 'internal scratch']
  %s0 = inlined_call_operand.vmem [shape: f32[2,10], index: 0, kind: input, shape index: {}]
  %s1 = inlined_call_operand.vmem [shape: s32[2,1], index: 1, kind: input, shape index: {}]
  %s2 = inlined_call_operand.hbm [shape: f32[1,1], index: 2, kind: output, shape index: {}]
  %s3 = sld [smem:[#allocation0]]
  $region18: #{tpu_custom_call.1} parent=0
    _
  %s5 = ssub.s32 1, %s3
  %s6 = scalar_select 0, %s5, %s3
  $region1: #{tpu_custom_call.1} parent=0
    #allocation2 [shape = 'u8[512]{0}', space=vmem, size = 0x400, scoped, tag = 'output window, operand 0, single buffered']
    #allocation3 [shape = 's32[1]{0}', space=sflag, size = 0x4, scoped, tag = 'scoped memory for tpu_custom_call.1']
    %7 = vsyncpa [#allocation3], 0
    // Predicated region
    $region2: #{tpu_custom_call.1} parent=1 // pred_check
      _
    $region3: #{tpu_custom_call.1} parent=1 // pred_check_branch
      %9 = sbr.rel (0) target = $region5
    $region4: #{tpu_custom_call.1} parent=1 // pred_region
      _
    $region5: #{tpu_custom_call.1} parent=1 // pred_fallthru
      _
    // Predicated region
    $region6: #{tpu_custom_call.1} parent=1 // pred_check
      _
    $region7: #{tpu_custom_call.1} parent=1 // pred_check_branch
      %11 = sbr.rel (0) target = $region9
    $region8: #{tpu_custom_call.1} parent=1 // pred_region
      _
    $region9: #{tpu_custom_call.1} parent=1 // pred_fallthru
      _
    %v12 = vld [vmem:[%s0] sm:$0x3]
    %vm13 = vcmask 74752
    %v14 = vsel %vm13, %v12, -inf
    %15 = vmax.xlane.f32.xlu0 %v14
    %v16 = vpop.xlane.xlu0 %15
    %v17 = vsub.f32 %v12, %v16
    %v18 = vmul.f32 %v17, 1.442695
    %v19 = vpow.pop %v18
    %v20 = vsel %vm13, %v19, 0.0
    %21 = vadd.xlane.f32.xlu0 %v20
    %v22 = vpop.xlane.xlu0 %21
    %v23 = vlog2.pop %v22
    %v24 = vmul.f32 %v23, 0.6931472
    %v25 = vadd.f32 %v24, %v16
    %v26 = vsub.f32 %v12, %v25
    %v27 = vlaneseq
    %v28 = vand.u32 %v27, 127
    %v29 = vld [vmem:[%s1] sm:$0x3]
    %30 = vset.pattern.permute.xlu0 0
    %31 = vperm.xlu0 %30, %v29
    %v32 = vpop.permute.xlu0 %31
    %vm33 = vcmp.eq.s32.totalorder %v28, %v32
    %v34 = vsel %vm33, %v26, 0.0
    %v35 = vsel %vm13, %v34, 0.0
    %36 = vadd.xlane.f32.xlu0 %v35
    %v37 = vpop.xlane.xlu0 %36
    %v38 = vrot.slane %v37, 4
    %v39 = vadd.f32 %v37, %v38
    %v40 = vrot.slane %v39, 2
    %v41 = vadd.f32 %v39, %v40
    %v42 = vrot.slane %v41, 1
    %v43 = vadd.f32 %v41, %v42
    %s44 = vtos %v43
    %v45 = vstv %s44
    %v46 = vsub.f32 0.0, %v45
    %v47 = vrcp.pop 2.0
    %v48 = vmul.f32 %v46, %v47
    %vm49 = vcmask 0
    %50 = vst.msk [vmem:[#allocation2] sm:$0x1] %vm49, %v48
    // Predicated region
    $region10: #{tpu_custom_call.1} parent=1 // pred_check
      _
    $region11: #{tpu_custom_call.1} parent=1 // pred_check_branch
      %52 = sbr.rel (0) target = $region13
    $region12: #{tpu_custom_call.1} parent=1 // pred_region
      %s54 = ssub.s32 16, 16
      %55 = vsyncadd [#allocation3], %s54
      %s57 = sshll.u32 [#allocation2], 4
      %s58 = int_to_ptr.vmem [resolvable:$true] %s57
      %60 = dma.vmem_to_hbm [thread:$0]  %s58, 16, %s2, [#allocation3]
    $region13: #{tpu_custom_call.1} parent=1 // pred_fallthru
      _
    // Predicated region
    $region14: #{tpu_custom_call.1} parent=1 // pred_check
      _
    $region15: #{tpu_custom_call.1} parent=1 // pred_check_branch
      %62 = sbr.rel (0) target = $region17
    $region16: #{tpu_custom_call.1} parent=1 // pred_region
      %63 = dma.done [#allocation3], 16
    $region17: #{tpu_custom_call.1} parent=1 // pred_fallthru
      _
    %64 = vsyncpa [#allocation3], 1

</llo_original>
